<compile_context>
chip_gen: v6e
topology: v6e:2x2x1
jax: 0.10.0
libtpu: 0.0.40
codegen_flags: <defaults>
</compile_context>

<pallas_src>
import jax
import jax.numpy as jnp
from jax.experimental import pallas as pl
from jax.experimental.pallas import tpu as pltpu


# ----------------------------- config glue -----------------------------------
class Qwen3Config:
    def __init__(self, vocab_size=151936, hidden_size=32, intermediate_size=3072,
                 num_hidden_layers=2, num_attention_heads=8, num_key_value_heads=4,
                 max_position_embeddings=5, rms_norm_eps=1e-06, rope_theta=1000000,
                 use_cache=True):
        self.vocab_size = vocab_size
        self.hidden_size = hidden_size
        self.intermediate_size = intermediate_size
        self.num_hidden_layers = num_hidden_layers
        self.num_attention_heads = num_attention_heads
        self.num_key_value_heads = num_key_value_heads
        self.max_position_embeddings = max_position_embeddings
        self.rms_norm_eps = rms_norm_eps
        self.rope_theta = rope_theta
        self.use_cache = use_cache


def inv_freq_compute(config: Qwen3Config) -> jnp.ndarray:
    """Deterministic buffer init, mirrors _inv_freq_compute."""
    base = config.rope_theta
    head_dim = config.hidden_size // config.num_attention_heads
    exponents = jnp.arange(0, head_dim, 2, dtype=jnp.float32) / head_dim
    return 1.0 / (base ** exponents)  # (head_dim // 2,)


# ------------------------------ Pallas kernel ---------------------------------
def _rope_kernel(pos_ref, inv_ref, cos_ref, sin_ref):
    # pos_ref: (tS, 1) int32   -- flattened position ids (column → sublanes)
    # inv_ref: (1, D)  f32     -- pre-duplicated inverse frequencies (lanes)
    # cos_ref/sin_ref: (tS, D) in output dtype
    pos = pos_ref[...].astype(jnp.float32)          # (tS, 1), VPU cast
    inv = inv_ref[...]                              # (1, D)
    emb = pos * inv                                 # (tS, D) f32, no concat
    cos_ref[...] = jnp.cos(emb).astype(cos_ref.dtype)
    sin_ref[...] = jnp.sin(emb).astype(sin_ref.dtype)
    # TODO(synk): if EUP-bound on v7x, compute cos/sin on a half-lane-packed
    # view (positions duplicated into both lane halves anyway) and expand via
    # XLU rolls to halve transcendental count.


def _pick_row_tile(rows: int, max_tile: int) -> int:
    """Largest tile <= max_tile that divides rows and is a multiple of 8."""
    if rows % 8 != 0:
        return rows                              # single full block (allowed)
    for cand in (max_tile, 2048, 1024, 512, 256, 128, 64, 32, 16, 8):
        if cand <= rows and cand % 8 == 0 and rows % cand == 0:
            return cand
    return rows


def rope_position_embedding(x: jnp.ndarray,
                            position_ids: jnp.ndarray,
                            inv_freq: jnp.ndarray,
                            *,
                            max_row_tile: int = 1024):
    """Returns (cos, sin) of shape (B, S, head_dim) in x.dtype."""
    B, S = position_ids.shape
    Dh = inv_freq.shape[0]
    D = 2 * Dh
    R = B * S

    # Pre-duplicate inv_freq host-side: emb = cat([freqs, freqs], -1) becomes a
    # single dense multiply against [inv_freq, inv_freq].
    inv_full = jnp.concatenate([inv_freq, inv_freq]).astype(jnp.float32).reshape(1, D)
    # Int32 positions; cast happens inside the kernel (no extra HBM round-trip).
    pos_rows = position_ids.reshape(R, 1).astype(jnp.int32)

    tS = _pick_row_tile(R, max_row_tile)
    grid = (R // tS,)

    out_sd = jax.ShapeDtypeStruct((R, D), x.dtype)

    cos_flat, sin_flat = pl.pallas_call(
        _rope_kernel,
        out_shape=(out_sd, out_sd),
        grid=grid,
        in_specs=[
            pl.BlockSpec((tS, 1), lambda r: (r, 0)),   # position rows
            pl.BlockSpec((1, D), lambda r: (0, 0)),    # shared inv_freq (dup'd)
        ],
        out_specs=(
            pl.BlockSpec((tS, D), lambda r: (r, 0)),
            pl.BlockSpec((tS, D), lambda r: (r, 0)),
        ),
        compiler_params=pltpu.CompilerParams(
            dimension_semantics=("parallel",),
            vmem_limit_bytes=64 << 20,
        ),
    )(pos_rows, inv_full)

    # Layout-preserving reshape back to (B, S, D).
    return cos_flat.reshape(B, S, D), sin_flat.reshape(B, S, D)


# ------------------------------ reference -------------------------------------
def rope_reference(x, position_ids, inv_freq):
    pos = position_ids.astype(jnp.float32)                       # (B, S)
    freqs = pos[:, :, None] * inv_freq[None, None, :]            # (B, S, Dh)
    emb = jnp.concatenate([freqs, freqs], axis=-1)               # (B, S, D)
    return jnp.cos(emb).astype(x.dtype), jnp.sin(emb).astype(x.dtype)


# --------------------------------- main ----------------------------------------
if __name__ == "__main__":
    # --- toy config matching the PyTorch module defaults ---
    cfg = Qwen3Config()          # hidden_size=32, heads=8 -> head_dim=4, Dh=2
    B, S = 2, 8
    head_dim = cfg.hidden_size // cfg.num_attention_heads

    key = jax.random.PRNGKey(0)
    kx, _ = jax.random.split(key)
    x = jax.random.normal(kx, (B, S, cfg.hidden_size), dtype=jnp.float32)
    position_ids = jnp.tile(jnp.arange(S, dtype=jnp.int32)[None, :], (B, 1))
    inv_freq = inv_freq_compute(cfg)                 # (head_dim // 2,)

    cos, sin = rope_position_embedding(x, position_ids, inv_freq)
    jax.block_until_ready((cos, sin))

    cos_ref, sin_ref = rope_reference(x, position_ids, inv_freq)
    assert cos.shape == (B, S, head_dim) and sin.shape == (B, S, head_dim)
    assert cos.dtype == x.dtype and sin.dtype == x.dtype
    assert jnp.allclose(cos, cos_ref, atol=1e-6, rtol=1e-6)
    assert jnp.allclose(sin, sin_ref, atol=1e-6, rtol=1e-6)

    # --- production-like shape (head_dim=128, longer S) to exercise tiling ---
    cfg2 = Qwen3Config(hidden_size=1024, num_attention_heads=8)  # head_dim=128
    B2, S2 = 2, 1024
    hd2 = cfg2.hidden_size // cfg2.num_attention_heads
    x2 = jnp.zeros((B2, S2, cfg2.hidden_size), dtype=jnp.bfloat16)
    pos2 = jnp.tile(jnp.arange(S2, dtype=jnp.int32)[None, :], (B2, 1))
    inv2 = inv_freq_compute(cfg2)

    cos2, sin2 = rope_position_embedding(x2, pos2, inv2)
    jax.block_until_ready((cos2, sin2))
    cos2_ref, sin2_ref = rope_reference(x2, pos2, inv2)
    assert cos2.shape == (B2, S2, hd2) and cos2.dtype == x2.dtype
    assert jnp.allclose(cos2.astype(jnp.float32), cos2_ref.astype(jnp.float32),
                        atol=1e-2, rtol=1e-2)
    assert jnp.allclose(sin2.astype(jnp.float32), sin2_ref.astype(jnp.float32),
                        atol=1e-2, rtol=1e-2)

    print("KERNEL_OK")
</pallas_src>

<mosaic_0001>
module attributes {stable_mosaic.version = 11 : i64} {
  func.func @_rope_kernel(%arg0: i32, %arg1: memref<16x1xi32, #tpu.memory_space<vmem>>, %arg2: memref<1x4xf32, #tpu.memory_space<vmem>>, %arg3: memref<16x4xf32, #tpu.memory_space<vmem>>, %arg4: memref<16x4xf32, #tpu.memory_space<vmem>>) attributes {dimension_semantics = [#tpu.dimension_semantics<parallel>], iteration_bounds = array<i64: 1>, scalar_prefetch = 0 : i64, scratch_operands = 0 : i64, tpu.core_type = #tpu.core_type<tc>, window_params = [{transform_indices = @transform_0, window_bounds = array<i64: 16, 1>}, {pipeline_mode = #tpu.pipeline_mode<synchronous>, transform_indices = @transform_1, window_bounds = array<i64: 1, 4>}, {transform_indices = @transform_2, window_bounds = array<i64: 16, 4>}, {transform_indices = @transform_3, window_bounds = array<i64: 16, 4>}]} {
    %c0 = arith.constant 0 : index
    %c0_0 = arith.constant 0 : index
    %0 = vector.load %arg1[%c0, %c0_0] : memref<16x1xi32, #tpu.memory_space<vmem>>, vector<16x1xi32>
    %1 = arith.sitofp %0 : vector<16x1xi32> to vector<16x1xf32>
    %c0_1 = arith.constant 0 : index
    %c0_2 = arith.constant 0 : index
    %2 = vector.load %arg2[%c0_1, %c0_2] : memref<1x4xf32, #tpu.memory_space<vmem>>, vector<1x4xf32>
    %3 = vector.broadcast %1 : vector<16x1xf32> to vector<16x4xf32>
    %4 = vector.broadcast %2 : vector<1x4xf32> to vector<16x4xf32>
    %5 = arith.mulf %3, %4 : vector<16x4xf32>
    %6 = math.cos %5 : vector<16x4xf32>
    %c0_3 = arith.constant 0 : index
    %c0_4 = arith.constant 0 : index
    %7 = vector.load %arg3[%c0_3, %c0_4] : memref<16x4xf32, #tpu.memory_space<vmem>>, vector<16x4xf32>
    tpu.vector_store %arg3[%c0_3, %c0_4], %6 {strides = array<i32>} : memref<16x4xf32, #tpu.memory_space<vmem>>, vector<16x4xf32>,
    %8 = math.sin %5 : vector<16x4xf32>
    %c0_5 = arith.constant 0 : index
    %c0_6 = arith.constant 0 : index
    %9 = vector.load %arg4[%c0_5, %c0_6] : memref<16x4xf32, #tpu.memory_space<vmem>>, vector<16x4xf32>
    tpu.vector_store %arg4[%c0_5, %c0_6], %8 {strides = array<i32>} : memref<16x4xf32, #tpu.memory_space<vmem>>, vector<16x4xf32>,
    return
  }
  func.func @transform_0(%arg0: i32) -> (i32, i32) {
    %c0_i32 = arith.constant 0 : i32
    %c0_i32_0 = arith.constant 0 : i32
    return %arg0, %c0_i32 : i32, i32
  }
  func.func @transform_1(%arg0: i32) -> (i32, i32) {
    %c0_i32 = arith.constant 0 : i32
    %c0_i32_0 = arith.constant 0 : i32
    %c0_i32_1 = arith.constant 0 : i32
    return %c0_i32, %c0_i32_0 : i32, i32
  }
  func.func @transform_2(%arg0: i32) -> (i32, i32) {
    %c0_i32 = arith.constant 0 : i32
    %c0_i32_0 = arith.constant 0 : i32
    return %arg0, %c0_i32 : i32, i32
  }
  func.func @transform_3(%arg0: i32) -> (i32, i32) {
    %c0_i32 = arith.constant 0 : i32
    %c0_i32_0 = arith.constant 0 : i32
    return %arg0, %c0_i32 : i32, i32
  }
}

</mosaic_0001>

<llo_original>
// kernel: tpu_custom_call.1
$region0: #{tpu_custom_call.1}
  #allocation0 [shape = 'u32[]', space=smem, size = 0x4, offset = 0x4, fixed_abs, tag = 'smem constant byte address 0x4 - core index']
  #allocation1 [shape = 'u32[144,128]{1,0:T(1,128)}', space=vmem, size = 0x12000, scoped, tag = 'internal scratch']
  %s0 = inlined_call_operand.vmem [shape: s32[16,1], index: 0, kind: input, shape index: {}]
  %s1 = inlined_call_operand.vmem [shape: f32[1,4], index: 1, kind: input, shape index: {}]
  %s2 = inlined_call_operand.vmem [shape: f32[16,4], index: 2, kind: output, shape index: {0}]
  %s3 = inlined_call_operand.vmem [shape: f32[16,4], index: 3, kind: output, shape index: {1}]
  %4 = xla_tuple %s2, %s3
  %s5 = sld [smem:[#allocation0]]
  $region26: #{tpu_custom_call.1} parent=0
    _
  %s7 = ssub.s32 1, %s5
  %s8 = scalar_select 0, %s7, %s5
  // Predicated region
  $region2: #{tpu_custom_call.1} parent=0 // pred_check
    _
  $region3: #{tpu_custom_call.1} parent=0 // pred_check_branch
    %10 = sbr.rel (0) target = $region5
  $region4: #{tpu_custom_call.1} parent=0 // pred_region
    _
  $region5: #{tpu_custom_call.1} parent=0 // pred_fallthru
    _
  // Predicated region
  $region6: #{tpu_custom_call.1} parent=0 // pred_check
    _
  $region7: #{tpu_custom_call.1} parent=0 // pred_check_branch
    %12 = sbr.rel (0) target = $region9
  $region8: #{tpu_custom_call.1} parent=0 // pred_region
    _
  $region9: #{tpu_custom_call.1} parent=0 // pred_fallthru
    _
  %v13 = vld [vmem:[%s0] sm:$0xff]
  %v14 = vld [vmem:[%s0 + $0x8] sm:$0xff]
  %v15 = vcvt.s32.f32 %v13
  %v16 = vcvt.s32.f32 %v14
  %v17 = vld [vmem:[%s1] sm:$0x1]
  %19 = vset.pattern.permute.xlu0 0
  %20 = vperm.xlu0 %19, %v15
  %v21 = vpop.permute.xlu0 %20
  %24 = vset.pattern.permute.xlu0 0
  %25 = vperm.xlu0 %24, %v16
  %v26 = vpop.permute.xlu0 %25
  %v29 = vlaneseq
  %v30 = vshrl.u32 %v29, 7
  %v31 = vsub.s32 0, %v30
  %v32 = vrot.slane %v17, %v31
  %v34 = vmul.f32 %v21, %v32
  %v35 = vmul.f32 %v26, %v32
  %v36 = vand.u32 2147483647, %v34
  %vm37 = vcmp.le.f32.partialorder %v36, 0.7853982
  %vm38 = vcmp.lt.s32.totalorder %v34, 0
  %v39 = vand.u32 %v34, 2139095040
  %v40 = vshrl.u32 %v39, 23
  %v41 = vsub.s32 %v40, 127
  %v42 = vand.u32 2147483647, %v34
  %v43 = vand.u32 %v42, 8388607
  %v44 = vor.u32 %v43, 8388608
  %v45 = vsub.s32 0, %v44
  %v46 = vadd.s32 %v41, 1
  %vm47 = vcmp.gt.s32.totalorder %v46, 0
  %v48 = vsel %vm47, %v46, 0
  %v49 = vshrl.u32 %v48, 5
  %v50 = vand.u32 %v48, 31
  %v51 = vsub.s32 32, %v50
  %v52 = vshrl.u32 683565275, %v51
  %v53 = vshll.u32 683565275, %v50
  %v54 = vshrl.u32 2475754826, %v51
  %v55 = vor.u32 %v53, %v54
  %v56 = vshll.u32 2475754826, %v50
  %v57 = vshrl.u32 2131351028, %v51
  %v58 = vor.u32 %v56, %v57
  %v59 = vshll.u32 2131351028, %v50
  %v60 = vshrl.u32 2102212464, %v51
  %v61 = vor.u32 %v59, %v60
  %v62 = vshll.u32 2102212464, %v50
  %v63 = vshrl.u32 920167782, %v51
  %v64 = vor.u32 %v62, %v63
  %v65 = vshll.u32 920167782, %v50
  %v66 = vshrl.u32 1326507024, %v51
  %v67 = vor.u32 %v65, %v66
  %vm68 = vcmp.lt.s32.totalorder %v49, 1
  %vm69 = vcmp.lt.s32.totalorder %v49, 2
  %vm70 = vcmp.lt.s32.totalorder %v49, 3
  %vm71 = vcmp.lt.s32.totalorder %v49, 4
  %v72 = vsel %vm68, %v52, %v55
  %v73 = vsel %vm71, %v61, 2102212464
  %v74 = vsel %vm70, %v58, %v73
  %v75 = vsel %vm69, %v72, %v74
  %v76 = vsel %vm68, %v55, %v58
  %v77 = vsel %vm71, %v64, 920167782
  %v78 = vsel %vm70, %v61, %v77
  %v79 = vsel %vm69, %v76, %v78
  %v80 = vsel %vm68, %v58, %v61
  %v81 = vsel %vm71, %v67, 1326507024
  %v82 = vsel %vm70, %v64, %v81
  %v83 = vsel %vm69, %v80, %v82
  %v84 = vshll.u32 %v44, 8
  %v85 = vmul.u32.u64.compose %v84, %v83
  %v86 = vextract.low.u32 %v85
  %v87 = vextract.high.u32 %v85
  %v88 = vmul.u32.u64.compose %v84, %v79
  %v89 = vextract.low.u32 %v88
  %v90 = vextract.high.u32 %v88
  %v91 = vmul.u32 %v84, %v75
  %v92 = vadd.s32 %v87, %v89
  %vm93 = vc.u32 %v87, %v89
  %v94 = vadd.s32 %v90, 1
  %v95 = vsel %vm93, %v94, %v90
  %v96 = vadd.s32 %v91, %v95
  %v97 = vadd.s32 %v96, 536870912
  %v98 = vshrl.u32 %v97, 30
  %v99 = vshll.u32 %v98, 30
  %v100 = vsub.s32 %v96, %v99
  %vm101 = vcmp.lt.s32.totalorder %v100, 0
  %v102 = vsub.s32 0, %v100
  %v103 = vsel %vm101, %v102, %v100
  %v104 = vclz %v103
  %v105 = vsub.s32 %v104, 2
  %vm106 = vcmp.gt.s32.totalorder 0, %v105
  %v107 = vsel %vm106, 0, %v105
  %v108 = vsub.s32 32, %v107
  %v109 = vshll.u32 %v100, %v107
  %v110 = vshrl.u32 %v92, %v108
  %v111 = vor.u32 %v109, %v110
  %v112 = vsub.s32 4294967266, %v107
  %v113 = vadd.s32 %v112, 127
  %v114 = vshll.u32 %v113, 23
  %v115 = vor.u32 4788187, %v114
  %v116 = vand.u32 2147483647, %v115
  %v118 = vcvt.s32.f32 %v111
  %v119 = vmul.f32 %v118, %v116
  %v120 = vxor.u32 %v119, 2147483648
  %v121 = vsel %vm38, %v120, %v119
  %v122 = vsub.s32 4, %v98
  %v123 = vsel %vm38, %v122, %v98
  %v124 = vsel %vm37, %v34, %v121
  %v125 = vsel %vm37, 0, %v123
  %v126 = vcosq.f32.pop %v124
  %v127 = vsinq.f32.pop %v124
  %vm128 = vweird.f32 %v34
  %v129 = vand.u32 %v125, 3
  %vm130 = vcmp.lt.s32.totalorder %v129, 2
  %vm131 = vcmp.eq.s32.totalorder %v129, 0
  %v132 = vxor.u32 %v127, 2147483648
  %v133 = vsel %vm131, %v126, %v132
  %vm134 = vcmp.eq.s32.totalorder %v129, 2
  %v135 = vxor.u32 %v126, 2147483648
  %v136 = vsel %vm134, %v135, %v127
  %v137 = vsel %vm130, %v133, %v136
  %v138 = vsel %vm128, nan, %v137
  %v139 = vand.u32 2147483647, %v35
  %vm140 = vcmp.le.f32.partialorder %v139, 0.7853982
  %vm141 = vcmp.lt.s32.totalorder %v35, 0
  %v142 = vand.u32 %v35, 2139095040
  %v143 = vshrl.u32 %v142, 23
  %v144 = vsub.s32 %v143, 127
  %v145 = vand.u32 2147483647, %v35
  %v146 = vand.u32 %v145, 8388607
  %v147 = vor.u32 %v146, 8388608
  %v148 = vsub.s32 0, %v147
  %v149 = vadd.s32 %v144, 1
  %vm150 = vcmp.gt.s32.totalorder %v149, 0
  %v151 = vsel %vm150, %v149, 0
  %v152 = vshrl.u32 %v151, 5
  %v153 = vand.u32 %v151, 31
  %v154 = vsub.s32 32, %v153
  %v155 = vshrl.u32 683565275, %v154
  %v156 = vshll.u32 683565275, %v153
  %v157 = vshrl.u32 2475754826, %v154
  %v158 = vor.u32 %v156, %v157
  %v159 = vshll.u32 2475754826, %v153
  %v160 = vshrl.u32 2131351028, %v154
  %v161 = vor.u32 %v159, %v160
  %v162 = vshll.u32 2131351028, %v153
  %v163 = vshrl.u32 2102212464, %v154
  %v164 = vor.u32 %v162, %v163
  %v165 = vshll.u32 2102212464, %v153
  %v166 = vshrl.u32 920167782, %v154
  %v167 = vor.u32 %v165, %v166
  %v168 = vshll.u32 920167782, %v153
  %v169 = vshrl.u32 1326507024, %v154
  %v170 = vor.u32 %v168, %v169
  %vm171 = vcmp.lt.s32.totalorder %v152, 1
  %vm172 = vcmp.lt.s32.totalorder %v152, 2
  %vm173 = vcmp.lt.s32.totalorder %v152, 3
  %vm174 = vcmp.lt.s32.totalorder %v152, 4
  %v175 = vsel %vm171, %v155, %v158
  %v176 = vsel %vm174, %v164, 2102212464
  %v177 = vsel %vm173, %v161, %v176
  %v178 = vsel %vm172, %v175, %v177
  %v179 = vsel %vm171, %v158, %v161
  %v180 = vsel %vm174, %v167, 920167782
  %v181 = vsel %vm173, %v164, %v180
  %v182 = vsel %vm172, %v179, %v181
  %v183 = vsel %vm171, %v161, %v164
  %v184 = vsel %vm174, %v170, 1326507024
  %v185 = vsel %vm173, %v167, %v184
  %v186 = vsel %vm172, %v183, %v185
  %v187 = vshll.u32 %v147, 8
  %v188 = vmul.u32.u64.compose %v187, %v186
  %v189 = vextract.low.u32 %v188
  %v190 = vextract.high.u32 %v188
  %v191 = vmul.u32.u64.compose %v187, %v182
  %v192 = vextract.low.u32 %v191
  %v193 = vextract.high.u32 %v191
  %v194 = vmul.u32 %v187, %v178
  %v195 = vadd.s32 %v190, %v192
  %vm196 = vc.u32 %v190, %v192
  %v197 = vadd.s32 %v193, 1
  %v198 = vsel %vm196, %v197, %v193
  %v199 = vadd.s32 %v194, %v198
  %v200 = vadd.s32 %v199, 536870912
  %v201 = vshrl.u32 %v200, 30
  %v202 = vshll.u32 %v201, 30
  %v203 = vsub.s32 %v199, %v202
  %vm204 = vcmp.lt.s32.totalorder %v203, 0
  %v205 = vsub.s32 0, %v203
  %v206 = vsel %vm204, %v205, %v203
  %v207 = vclz %v206
  %v208 = vsub.s32 %v207, 2
  %vm209 = vcmp.gt.s32.totalorder 0, %v208
  %v210 = vsel %vm209, 0, %v208
  %v211 = vsub.s32 32, %v210
  %v212 = vshll.u32 %v203, %v210
  %v213 = vshrl.u32 %v195, %v211
  %v214 = vor.u32 %v212, %v213
  %v215 = vsub.s32 4294967266, %v210
  %v216 = vadd.s32 %v215, 127
  %v217 = vshll.u32 %v216, 23
  %v218 = vor.u32 4788187, %v217
  %v219 = vand.u32 2147483647, %v218
  %v221 = vcvt.s32.f32 %v214
  %v222 = vmul.f32 %v221, %v219
  %v223 = vxor.u32 %v222, 2147483648
  %v224 = vsel %vm141, %v223, %v222
  %v225 = vsub.s32 4, %v201
  %v226 = vsel %vm141, %v225, %v201
  %v227 = vsel %vm140, %v35, %v224
  %v228 = vsel %vm140, 0, %v226
  %v229 = vcosq.f32.pop %v227
  %v230 = vsinq.f32.pop %v227
  %vm231 = vweird.f32 %v35
  %v232 = vand.u32 %v228, 3
  %vm233 = vcmp.lt.s32.totalorder %v232, 2
  %vm234 = vcmp.eq.s32.totalorder %v232, 0
  %v235 = vxor.u32 %v230, 2147483648
  %v236 = vsel %vm234, %v229, %v235
  %vm237 = vcmp.eq.s32.totalorder %v232, 2
  %v238 = vxor.u32 %v229, 2147483648
  %v239 = vsel %vm237, %v238, %v230
  %v240 = vsel %vm233, %v236, %v239
  %v241 = vsel %vm231, nan, %v240
  %vm242 = vcmask 31744
  %243 = vst.msk [vmem:[%s2] sm:$0xff] %vm242, %v138
  %244 = vst.msk [vmem:[%s2 + $0x8] sm:$0xff] %vm242, %v241
  %v245 = vand.u32 2147483647, %v34
  %vm246 = vcmp.le.f32.partialorder %v245, 0.7853982
  %vm247 = vcmp.lt.s32.totalorder %v34, 0
  %v248 = vand.u32 %v34, 2139095040
  %v249 = vshrl.u32 %v248, 23
  %v250 = vsub.s32 %v249, 127
  %v251 = vand.u32 2147483647, %v34
  %v252 = vand.u32 %v251, 8388607
  %v253 = vor.u32 %v252, 8388608
  %v254 = vsub.s32 0, %v253
  %v255 = vadd.s32 %v250, 1
  %vm256 = vcmp.gt.s32.totalorder %v255, 0
  %v257 = vsel %vm256, %v255, 0
  %v258 = vshrl.u32 %v257, 5
  %v259 = vand.u32 %v257, 31
  %v260 = vsub.s32 32, %v259
  %v261 = vshrl.u32 683565275, %v260
  %v262 = vshll.u32 683565275, %v259
  %v263 = vshrl.u32 2475754826, %v260
  %v264 = vor.u32 %v262, %v263
  %v265 = vshll.u32 2475754826, %v259
  %v266 = vshrl.u32 2131351028, %v260
  %v267 = vor.u32 %v265, %v266
  %v268 = vshll.u32 2131351028, %v259
  %v269 = vshrl.u32 2102212464, %v260
  %v270 = vor.u32 %v268, %v269
  %v271 = vshll.u32 2102212464, %v259
  %v272 = vshrl.u32 920167782, %v260
  %v273 = vor.u32 %v271, %v272
  %v274 = vshll.u32 920167782, %v259
  %v275 = vshrl.u32 1326507024, %v260
  %v276 = vor.u32 %v274, %v275
  %vm277 = vcmp.lt.s32.totalorder %v258, 1
  %vm278 = vcmp.lt.s32.totalorder %v258, 2
  %vm279 = vcmp.lt.s32.totalorder %v258, 3
  %vm280 = vcmp.lt.s32.totalorder %v258, 4
  %v281 = vsel %vm277, %v261, %v264
  %v282 = vsel %vm280, %v270, 2102212464
  %v283 = vsel %vm279, %v267, %v282
  %v284 = vsel %vm278, %v281, %v283
  %v285 = vsel %vm277, %v264, %v267
  %v286 = vsel %vm280, %v273, 920167782
  %v287 = vsel %vm279, %v270, %v286
  %v288 = vsel %vm278, %v285, %v287
  %v289 = vsel %vm277, %v267, %v270
  %v290 = vsel %vm280, %v276, 1326507024
  %v291 = vsel %vm279, %v273, %v290
  %v292 = vsel %vm278, %v289, %v291
  %v293 = vshll.u32 %v253, 8
  %v294 = vmul.u32.u64.compose %v293, %v292
  %v295 = vextract.low.u32 %v294
  %v296 = vextract.high.u32 %v294
  %v297 = vmul.u32.u64.compose %v293, %v288
  %v298 = vextract.low.u32 %v297
  %v299 = vextract.high.u32 %v297
  %v300 = vmul.u32 %v293, %v284
  %v301 = vadd.s32 %v296, %v298
  %vm302 = vc.u32 %v296, %v298
  %v303 = vadd.s32 %v299, 1
  %v304 = vsel %vm302, %v303, %v299
  %v305 = vadd.s32 %v300, %v304
  %v306 = vadd.s32 %v305, 536870912
  %v307 = vshrl.u32 %v306, 30
  %v308 = vshll.u32 %v307, 30
  %v309 = vsub.s32 %v305, %v308
  %vm310 = vcmp.lt.s32.totalorder %v309, 0
  %v311 = vsub.s32 0, %v309
  %v312 = vsel %vm310, %v311, %v309
  %v313 = vclz %v312
  %v314 = vsub.s32 %v313, 2
  %vm315 = vcmp.gt.s32.totalorder 0, %v314
  %v316 = vsel %vm315, 0, %v314
  %v317 = vsub.s32 32, %v316
  %v318 = vshll.u32 %v309, %v316
  %v319 = vshrl.u32 %v301, %v317
  %v320 = vor.u32 %v318, %v319
  %v321 = vsub.s32 4294967266, %v316
  %v322 = vadd.s32 %v321, 127
  %v323 = vshll.u32 %v322, 23
  %v324 = vor.u32 4788187, %v323
  %v325 = vand.u32 2147483647, %v324
  %v327 = vcvt.s32.f32 %v320
  %v328 = vmul.f32 %v327, %v325
  %v329 = vxor.u32 %v328, 2147483648
  %v330 = vsel %vm247, %v329, %v328
  %v331 = vsub.s32 4, %v307
  %v332 = vsel %vm247, %v331, %v307
  %v333 = vsel %vm246, %v34, %v330
  %v334 = vsel %vm246, 0, %v332
  %v335 = vcosq.f32.pop %v333
  %v336 = vsinq.f32.pop %v333
  %vm337 = vweird.f32 %v34
  %v338 = vadd.s32 %v334, 3
  %v339 = vand.u32 %v338, 3
  %vm340 = vcmp.lt.s32.totalorder %v339, 2
  %vm341 = vcmp.eq.s32.totalorder %v339, 0
  %v342 = vxor.u32 %v336, 2147483648
  %v343 = vsel %vm341, %v335, %v342
  %vm344 = vcmp.eq.s32.totalorder %v339, 2
  %v345 = vxor.u32 %v335, 2147483648
  %v346 = vsel %vm344, %v345, %v336
  %v347 = vsel %vm340, %v343, %v346
  %v348 = vsel %vm337, nan, %v347
  %v349 = vand.u32 2147483647, %v35
  %vm350 = vcmp.le.f32.partialorder %v349, 0.7853982
  %vm351 = vcmp.lt.s32.totalorder %v35, 0
  %v352 = vand.u32 %v35, 2139095040
  %v353 = vshrl.u32 %v352, 23
  %v354 = vsub.s32 %v353, 127
  %v355 = vand.u32 2147483647, %v35
  %v356 = vand.u32 %v355, 8388607
  %v357 = vor.u32 %v356, 8388608
  %v358 = vsub.s32 0, %v357
  %v359 = vadd.s32 %v354, 1
  %vm360 = vcmp.gt.s32.totalorder %v359, 0
  %v361 = vsel %vm360, %v359, 0
  %v362 = vshrl.u32 %v361, 5
  %v363 = vand.u32 %v361, 31
  %v364 = vsub.s32 32, %v363
  %v365 = vshrl.u32 683565275, %v364
  %v366 = vshll.u32 683565275, %v363
  %v367 = vshrl.u32 2475754826, %v364
  %v368 = vor.u32 %v366, %v367
  %v369 = vshll.u32 2475754826, %v363
  %v370 = vshrl.u32 2131351028, %v364
  %v371 = vor.u32 %v369, %v370
  %v372 = vshll.u32 2131351028, %v363
  %v373 = vshrl.u32 2102212464, %v364
  %v374 = vor.u32 %v372, %v373
  %v375 = vshll.u32 2102212464, %v363
  %v376 = vshrl.u32 920167782, %v364
  %v377 = vor.u32 %v375, %v376
  %v378 = vshll.u32 920167782, %v363
  %v379 = vshrl.u32 1326507024, %v364
  %v380 = vor.u32 %v378, %v379
  %vm381 = vcmp.lt.s32.totalorder %v362, 1
  %vm382 = vcmp.lt.s32.totalorder %v362, 2
  %vm383 = vcmp.lt.s32.totalorder %v362, 3
  %vm384 = vcmp.lt.s32.totalorder %v362, 4
  %v385 = vsel %vm381, %v365, %v368
  %v386 = vsel %vm384, %v374, 2102212464
  %v387 = vsel %vm383, %v371, %v386
  %v388 = vsel %vm382, %v385, %v387
  %v389 = vsel %vm381, %v368, %v371
  %v390 = vsel %vm384, %v377, 920167782
  %v391 = vsel %vm383, %v374, %v390
  %v392 = vsel %vm382, %v389, %v391
  %v393 = vsel %vm381, %v371, %v374
  %v394 = vsel %vm384, %v380, 1326507024
  %v395 = vsel %vm383, %v377, %v394
  %v396 = vsel %vm382, %v393, %v395
  %v397 = vshll.u32 %v357, 8
  %v398 = vmul.u32.u64.compose %v397, %v396
  %v399 = vextract.low.u32 %v398
  %v400 = vextract.high.u32 %v398
  %v401 = vmul.u32.u64.compose %v397, %v392
  %v402 = vextract.low.u32 %v401
  %v403 = vextract.high.u32 %v401
  %v404 = vmul.u32 %v397, %v388
  %v405 = vadd.s32 %v400, %v402
  %vm406 = vc.u32 %v400, %v402
  %v407 = vadd.s32 %v403, 1
  %v408 = vsel %vm406, %v407, %v403
  %v409 = vadd.s32 %v404, %v408
  %v410 = vadd.s32 %v409, 536870912
  %v411 = vshrl.u32 %v410, 30
  %v412 = vshll.u32 %v411, 30
  %v413 = vsub.s32 %v409, %v412
  %vm414 = vcmp.lt.s32.totalorder %v413, 0
  %v415 = vsub.s32 0, %v413
  %v416 = vsel %vm414, %v415, %v413
  %v417 = vclz %v416
  %v418 = vsub.s32 %v417, 2
  %vm419 = vcmp.gt.s32.totalorder 0, %v418
  %v420 = vsel %vm419, 0, %v418
  %v421 = vsub.s32 32, %v420
  %v422 = vshll.u32 %v413, %v420
  %v423 = vshrl.u32 %v405, %v421
  %v424 = vor.u32 %v422, %v423
  %v425 = vsub.s32 4294967266, %v420
  %v426 = vadd.s32 %v425, 127
  %v427 = vshll.u32 %v426, 23
  %v428 = vor.u32 4788187, %v427
  %v429 = vand.u32 2147483647, %v428
  %v431 = vcvt.s32.f32 %v424
  %v432 = vmul.f32 %v431, %v429
  %v433 = vxor.u32 %v432, 2147483648
  %v434 = vsel %vm351, %v433, %v432
  %v435 = vsub.s32 4, %v411
  %v436 = vsel %vm351, %v435, %v411
  %v437 = vsel %vm350, %v35, %v434
  %v438 = vsel %vm350, 0, %v436
  %v439 = vcosq.f32.pop %v437
  %v440 = vsinq.f32.pop %v437
  %vm441 = vweird.f32 %v35
  %v442 = vadd.s32 %v438, 3
  %v443 = vand.u32 %v442, 3
  %vm444 = vcmp.lt.s32.totalorder %v443, 2
  %vm445 = vcmp.eq.s32.totalorder %v443, 0
  %v446 = vxor.u32 %v440, 2147483648
  %v447 = vsel %vm445, %v439, %v446
  %vm448 = vcmp.eq.s32.totalorder %v443, 2
  %v449 = vxor.u32 %v439, 2147483648
  %v450 = vsel %vm448, %v449, %v440
  %v451 = vsel %vm444, %v447, %v450
  %v452 = vsel %vm441, nan, %v451
  %453 = vst.msk [vmem:[%s3] sm:$0xff] %vm242, %v348
  %454 = vst.msk [vmem:[%s3 + $0x8] sm:$0xff] %vm242, %v452
  // Predicated region
  $region10: #{tpu_custom_call.1} parent=0 // pred_check
    _
  $region11: #{tpu_custom_call.1} parent=0 // pred_check_branch
    %456 = sbr.rel (0) target = $region13
  $region12: #{tpu_custom_call.1} parent=0 // pred_region
    _
  $region13: #{tpu_custom_call.1} parent=0 // pred_fallthru
    _
  // Predicated region
  $region14: #{tpu_custom_call.1} parent=0 // pred_check
    _
  $region15: #{tpu_custom_call.1} parent=0 // pred_check_branch
    %458 = sbr.rel (0) target = $region17
  $region16: #{tpu_custom_call.1} parent=0 // pred_region
    _
  $region17: #{tpu_custom_call.1} parent=0 // pred_fallthru
    _
  // Predicated region
  $region18: #{tpu_custom_call.1} parent=0 // pred_check
    _
  $region19: #{tpu_custom_call.1} parent=0 // pred_check_branch
    %460 = sbr.rel (0) target = $region21
  $region20: #{tpu_custom_call.1} parent=0 // pred_region
    _
  $region21: #{tpu_custom_call.1} parent=0 // pred_fallthru
    _
  // Predicated region
  $region22: #{tpu_custom_call.1} parent=0 // pred_check
    _
  $region23: #{tpu_custom_call.1} parent=0 // pred_check_branch
    %462 = sbr.rel (0) target = $region25
  $region24: #{tpu_custom_call.1} parent=0 // pred_region
    _
  $region25: #{tpu_custom_call.1} parent=0 // pred_fallthru
    _

</llo_original>
